<compile_context>
chip_gen: v7x
topology: tpu7x:2x2x1
jax: 0.10.0
libtpu: 0.0.40
codegen_flags: <defaults>
</compile_context>

<pallas_src>
import functools

import numpy as np
import jax
import jax.numpy as jnp
from jax.experimental import pallas as pl
from jax.experimental.pallas import tpu as pltpu

_SMEM = pltpu.MemorySpace.SMEM
_VMEM = pltpu.MemorySpace.VMEM
_EPS = 1e-9  # the torch reference adds eps to the difference itself


def _fused_loss_kernel(params_ref, cls_ref, ylab_ref, bp_ref, bg_ref,
                       lp_ref, lg_ref, desc_ref, clab_ref, out_ref, *,
                       use_cls, use_blur, use_con, use_loc):
    # params (SMEM f32[16]):
    #   [0..3] w_cls, w_blur, w_con, w_loc   [4] margin
    #   [5..8] gate_cls, gate_blur, gate_con, gate_loc (1.0 iff weight > 0)
    w_cls, w_blur, w_con, w_loc = (params_ref[0], params_ref[1],
                                   params_ref[2], params_ref[3])
    margin = params_ref[4]
    g_cls, g_blur, g_con, g_loc = (params_ref[5], params_ref[6],
                                   params_ref[7], params_ref[8])

    zero = jnp.zeros((1, 1), jnp.float32)
    l_cls = l_blur = l_con = l_loc = zero

    # ---- classification: mean_i [logsumexp(x_i) - x_i[y_i]], no one-hot ----
    if use_cls:
        logits = cls_ref[...].astype(jnp.float32)                # (N, C)
        labels = ylab_ref[...]                                    # (N, 1) int32
        n, c = logits.shape
        col = jax.lax.broadcasted_iota(jnp.int32, (n, c), 1)
        sel = col == labels
        m = jnp.max(logits, axis=1, keepdims=True)
        lse = m + jnp.log(jnp.sum(jnp.exp(logits - m), axis=1, keepdims=True))
        correct = jnp.sum(jnp.where(sel, logits, 0.0), axis=1, keepdims=True)
        l_cls = jnp.sum(lse - correct, axis=0, keepdims=True) * (1.0 / n)
        l_cls = l_cls * g_cls  # torch reports 0 for this loss when weight <= 0

    # ---- L1 means on natural 2-D shapes; count from the static ref shape ----
    def _l1_mean(a_ref, b_ref):
        a = a_ref[...].astype(jnp.float32)
        b = b_ref[...].astype(jnp.float32)
        cnt = 1
        for s in a_ref.shape:
            cnt *= int(s)
        d = jnp.abs(a - b)
        s = jnp.sum(jnp.sum(d, axis=1, keepdims=True), axis=0, keepdims=True)
        return s * (1.0 / cnt)

    if use_blur:
        l_blur = _l1_mean(bp_ref, bg_ref) * g_blur
    if use_loc:
        l_loc = _l1_mean(lp_ref, lg_ref) * g_loc

    # ---- contrastive: SUM over (query, compare) pairs (matches torch) ----
    if use_con:
        d3 = desc_ref[...].astype(jnp.float32)    # (D, NQ, NIPQ)
        lab = clab_ref[...].astype(jnp.float32)   # (NQ, NIPQ); -1 in column 0
        q = d3[:, :, 0:1]                         # query column, broadcast
        diff = q - d3 + _EPS                      # torch: (queries - compares + eps)
        d2 = jnp.sum(diff * diff, axis=0)         # (NQ, NIPQ)
        dist = jnp.sqrt(d2)                       # EUP; hinge branch only
        hinge = jnp.maximum(margin - dist, 0.0)
        per = 0.5 * lab * d2 + 0.5 * (1.0 - lab) * (hinge * hinge)
        nq_, nipq_ = per.shape
        j = jax.lax.broadcasted_iota(jnp.int32, (nq_, nipq_), 1)
        per = jnp.where(j >= 1, per, 0.0)         # drop query-vs-itself column
        l_con = jnp.sum(jnp.sum(per, axis=1, keepdims=True),
                        axis=0, keepdims=True)
        l_con = l_con * g_con

    total = w_cls * l_cls + w_blur * l_blur + w_con * l_con + w_loc * l_loc

    # ---- single lane-dense (1,128) output: [total, cls, blur, con, loc, 0..] ----
    lane = jax.lax.broadcasted_iota(jnp.int32, (1, 128), 1)
    out = (jnp.where(lane == 0, total, 0.0)
           + jnp.where(lane == 1, l_cls, 0.0)
           + jnp.where(lane == 2, l_blur, 0.0)
           + jnp.where(lane == 3, l_con, 0.0)
           + jnp.where(lane == 4, l_loc, 0.0))
    out_ref[...] = out


@functools.partial(
    jax.jit,
    static_argnames=("use_cls", "use_blur", "use_con", "use_loc", "nq", "nipq"))
def _blur_retrieval_forward(cls_pred, cls_gt, blur_pred, blur_gt,
                            descriptors, con_labels, loc_pred, loc_gt, params,
                            *, use_cls, use_blur, use_con, use_loc, nq, nipq):
    f32 = jnp.float32

    if use_cls:
        logits = jnp.asarray(cls_pred)
        if logits.ndim == 1:
            logits = logits.reshape(1, -1)
        labels = jnp.asarray(cls_gt).astype(jnp.int32).reshape(-1, 1)
    else:
        logits = jnp.zeros((1, 8), f32)
        labels = jnp.zeros((1, 1), jnp.int32)

    if use_blur:
        # torch: F.l1_loss(pred.squeeze(), gt.squeeze()); both sides flatten
        # identically so elementwise pairing is preserved (shapes must match).
        bp = jnp.asarray(blur_pred).reshape(1, -1)
        bg = jnp.asarray(blur_gt).reshape(1, -1)
    else:
        bp = bg = jnp.zeros((1, 8), f32)

    if use_loc:
        lp = jnp.asarray(loc_pred)
        lg = jnp.asarray(loc_gt)
        lp = lp.reshape(-1, lp.shape[-1]) if lp.ndim != 2 else lp
        lg = lg.reshape(-1, lg.shape[-1]) if lg.ndim != 2 else lg
    else:
        lp = lg = jnp.zeros((1, 8), f32)

    if use_con:
        desc = jnp.asarray(descriptors)
        d_dim = desc.shape[0]
        # Queries sit at every nipq-th column (what torch's `[:, ::nipq]` +
        # repeat_interleave encodes), so a free reshape replaces both gathers.
        desc3 = desc.reshape(d_dim, nq, nipq)
        lab2 = jnp.asarray(con_labels).astype(f32).reshape(nq, nipq)
    else:
        desc3 = jnp.zeros((1, 1, 8), f32)
        lab2 = jnp.zeros((1, 8), f32)

    kernel = functools.partial(_fused_loss_kernel, use_cls=use_cls,
                               use_blur=use_blur, use_con=use_con,
                               use_loc=use_loc)

    # VMEM limit derived from what is actually resident (+4x headroom for
    # Mosaic scratch / double buffers); the cap stays safe on v5e/v6e/v7x.
    # TODO(synk): if blur/loc ever become large pixel-wise maps, switch them to
    # a row-tiled 1-D grid with a VMEM accumulator (parallel axis for v7x's
    # 2 TCs) instead of this grid-less whole-array load.
    resident = sum(int(np.prod(a.shape)) * a.dtype.itemsize
                   for a in (logits, labels, bp, bg, lp, lg, desc3, lab2))
    vmem_limit = int(min(32 << 20, max(8 << 20, 4 * resident)))

    out = pl.pallas_call(
        kernel,
        out_shape=jax.ShapeDtypeStruct((1, 128), f32),
        in_specs=[pl.BlockSpec(memory_space=_SMEM)]
                 + [pl.BlockSpec(memory_space=_VMEM)] * 8,
        out_specs=pl.BlockSpec(memory_space=_VMEM),
        compiler_params=pltpu.CompilerParams(vmem_limit_bytes=vmem_limit),
    )(params, logits, labels, bp, bg, lp, lg, desc3, lab2)

    return out[0, 0], out[0, 1], out[0, 2], out[0, 3], out[0, 4]


class BlurRetrievalLoss:
    """JAX/Pallas port of the PyTorch BlurRetrievalLoss forward pass."""

    def __init__(self, loss_weights=None, contrastive_margin=0.7):
        self.contrastive_margin = float(contrastive_margin)
        self.loss_weights = (loss_weights if loss_weights is not None
                             else self.get_default_loss_weights())
        # batch_size -> (num_queries, imgs_per_query); read from the labels
        # once per batch structure so steady-state calls never sync to host.
        self._con_struct_cache = {}

    def set_loss_weights(self, loss_weights):
        self.loss_weights = loss_weights

    @staticmethod
    def get_default_loss_weights():
        return {
            "cls_loss_weight": 1.0,
            "blur_estimation_loss_weight": 1.0,
            "contrastive_loss_weight": 1.0,
            "loc_loss_weight": 1.0,
        }

    def _contrastive_structure(self, descriptors, labels):
        batch = int(descriptors.shape[1])
        if batch not in self._con_struct_cache:
            labels_np = np.asarray(labels)   # one-time host read, then cached
            num_queries = int(np.sum(labels_np == -1))
            self._con_struct_cache[batch] = (num_queries, batch // num_queries)
        return self._con_struct_cache[batch]

    def __call__(self, pred, gt):
        w = self.loss_weights
        use_cls = pred[0] is not None and gt[0] is not None
        use_blur = pred[1] is not None and gt[1] is not None
        use_con = pred[2] is not None and gt[2] is not None
        use_loc = pred[3] is not None and gt[3] is not None

        wc = float(w["cls_loss_weight"])
        wb = float(w["blur_estimation_loss_weight"])
        wn = float(w["contrastive_loss_weight"])
        wl = float(w["loc_loss_weight"])
        # Weights / margin / gates are runtime DATA (SMEM), not compile-time
        # constants, so set_loss_weights never triggers a recompile.
        params = jnp.asarray(
            [wc, wb, wn, wl, self.contrastive_margin,
             1.0 if wc > 0 else 0.0, 1.0 if wb > 0 else 0.0,
             1.0 if wn > 0 else 0.0, 1.0 if wl > 0 else 0.0,
             0.0, 0.0, 0.0, 0.0, 0.0, 0.0, 0.0], dtype=jnp.float32)

        nq = nipq = 1
        if use_con:
            nq, nipq = self._contrastive_structure(pred[2], gt[2])

        return _blur_retrieval_forward(
            pred[0] if use_cls else None, gt[0] if use_cls else None,
            pred[1] if use_blur else None, gt[1] if use_blur else None,
            pred[2] if use_con else None, gt[2] if use_con else None,
            pred[3] if use_loc else None, gt[3] if use_loc else None,
            params,
            use_cls=use_cls, use_blur=use_blur, use_con=use_con,
            use_loc=use_loc, nq=nq, nipq=nipq)


if __name__ == "__main__":
    key = jax.random.PRNGKey(0)
    k1, k2, k3, k4, k5, k6 = jax.random.split(key, 6)

    N, C = 8, 16            # classification
    D, NQ, NIPQ = 32, 2, 4  # contrastive: descriptor dim, queries, imgs/query
    B = NQ * NIPQ

    cls_pred = jax.random.normal(k1, (N, C), dtype=jnp.float32)
    cls_gt = jax.random.randint(k2, (N,), 0, C, dtype=jnp.int32)

    blur_pred = jax.random.normal(k3, (N, 1), dtype=jnp.float32)
    blur_gt = jax.random.normal(k4, (N,), dtype=jnp.float32)

    descriptors = jax.random.normal(k5, (D, B), dtype=jnp.float32)
    labels_np = np.array([-1, 1, 0, 1, -1, 0, 1, 0], dtype=np.float32)

    loc_pred = jax.random.normal(k6, (N, 4), dtype=jnp.float32)
    loc_gt = loc_pred + 0.1

    crit = BlurRetrievalLoss()
    pred = (cls_pred, blur_pred, descriptors, loc_pred)
    gt = (cls_gt, blur_gt, labels_np, loc_gt)

    out = jax.block_until_ready(crit(pred, gt))
    total, l_cls, l_blur, l_con, l_loc = [np.asarray(o) for o in out]

    # ---- pure-numpy reference (forward-pass semantics of the torch spec) ----
    logits = np.asarray(cls_pred, np.float32)
    y = np.asarray(cls_gt)
    m = logits.max(1, keepdims=True)
    lse = m[:, 0] + np.log(np.exp(logits - m).sum(1))
    ref_cls = float(np.mean(lse - logits[np.arange(N), y]))

    ref_blur = float(np.mean(np.abs(np.asarray(blur_pred).squeeze()
                                    - np.asarray(blur_gt).squeeze())))
    ref_loc = float(np.mean(np.abs(np.asarray(loc_pred) - np.asarray(loc_gt))))

    d = np.asarray(descriptors, np.float32)
    nq = int(np.sum(labels_np == -1)); nipq = B // nq; nc = nipq - 1
    qi = np.repeat(np.arange(0, B, nipq), nc)
    ci = np.nonzero(labels_np != -1)[0]
    lab = labels_np[labels_np != -1].astype(np.float32)
    diff = d[:, qi] - d[:, ci] + 1e-9
    dist = np.sqrt((diff * diff).sum(0))
    ref_con = float(np.sum(0.5 * lab * dist ** 2
                           + 0.5 * (1.0 - lab)
                           * np.maximum(0.7 - dist, 0.0) ** 2))
    ref_total = ref_cls + ref_blur + ref_con + ref_loc

    np.testing.assert_allclose(l_cls, ref_cls, rtol=1e-4, atol=1e-5)
    np.testing.assert_allclose(l_blur, ref_blur, rtol=1e-4, atol=1e-5)
    np.testing.assert_allclose(l_con, ref_con, rtol=1e-4, atol=1e-5)
    np.testing.assert_allclose(l_loc, ref_loc, rtol=1e-4, atol=1e-5)
    np.testing.assert_allclose(total, ref_total, rtol=1e-4, atol=1e-5)

    # Weight change is data-only (SMEM params): same compiled kernel, gated.
    crit.set_loss_weights({"cls_loss_weight": 0.0,
                           "blur_estimation_loss_weight": 2.0,
                           "contrastive_loss_weight": 1.0,
                           "loc_loss_weight": 1.0})
    out2 = jax.block_until_ready(crit(pred, gt))
    t2, c2, _, _, _ = [np.asarray(o) for o in out2]
    np.testing.assert_allclose(c2, 0.0, atol=1e-6)
    np.testing.assert_allclose(t2, 2.0 * ref_blur + ref_con + ref_loc,
                               rtol=1e-4, atol=1e-5)

    print("KERNEL_OK")
</pallas_src>

<mosaic_0001>
module attributes {stable_mosaic.version = 11 : i64} {
  func.func @_fused_loss_kernel(%arg0: memref<16xf32, #tpu.memory_space<smem>>, %arg1: memref<8x16xf32, #tpu.memory_space<vmem>>, %arg2: memref<8x1xi32, #tpu.memory_space<vmem>>, %arg3: memref<1x8xf32, #tpu.memory_space<vmem>>, %arg4: memref<1x8xf32, #tpu.memory_space<vmem>>, %arg5: memref<8x4xf32, #tpu.memory_space<vmem>>, %arg6: memref<8x4xf32, #tpu.memory_space<vmem>>, %arg7: memref<32x2x4xf32, #tpu.memory_space<vmem>>, %arg8: memref<2x4xf32, #tpu.memory_space<vmem>>, %arg9: memref<1x128xf32, #tpu.memory_space<vmem>>) attributes {dimension_semantics = [], scalar_prefetch = 0 : i64, scratch_operands = 0 : i64, tpu.core_type = #tpu.core_type<tc>} {
    %c0 = arith.constant 0 : index
    %0 = memref.load %arg0[%c0] : memref<16xf32, #tpu.memory_space<smem>>
    %c1 = arith.constant 1 : index
    %1 = memref.load %arg0[%c1] : memref<16xf32, #tpu.memory_space<smem>>
    %c2 = arith.constant 2 : index
    %2 = memref.load %arg0[%c2] : memref<16xf32, #tpu.memory_space<smem>>
    %c3 = arith.constant 3 : index
    %3 = memref.load %arg0[%c3] : memref<16xf32, #tpu.memory_space<smem>>
    %c4 = arith.constant 4 : index
    %4 = memref.load %arg0[%c4] : memref<16xf32, #tpu.memory_space<smem>>
    %c5 = arith.constant 5 : index
    %5 = memref.load %arg0[%c5] : memref<16xf32, #tpu.memory_space<smem>>
    %c6 = arith.constant 6 : index
    %6 = memref.load %arg0[%c6] : memref<16xf32, #tpu.memory_space<smem>>
    %c7 = arith.constant 7 : index
    %7 = memref.load %arg0[%c7] : memref<16xf32, #tpu.memory_space<smem>>
    %c8 = arith.constant 8 : index
    %8 = memref.load %arg0[%c8] : memref<16xf32, #tpu.memory_space<smem>>
    %c0_0 = arith.constant 0 : index
    %c0_1 = arith.constant 0 : index
    %9 = vector.load %arg1[%c0_0, %c0_1] : memref<8x16xf32, #tpu.memory_space<vmem>>, vector<8x16xf32>
    %c0_2 = arith.constant 0 : index
    %c0_3 = arith.constant 0 : index
    %10 = vector.load %arg2[%c0_2, %c0_3] : memref<8x1xi32, #tpu.memory_space<vmem>>, vector<8x1xi32>
    %11 = tpu.iota {dimensions = array<i32: 1>} : vector<8x16xi32>
    %12 = vector.broadcast %10 : vector<8x1xi32> to vector<8x16xi32>
    %13 = arith.cmpi eq, %11, %12 : vector<8x16xi32>
    %cst = arith.constant dense<0xFF800000> : vector<8xf32>
    %14 = vector.multi_reduction <maximumf>, %9, %cst [1] : vector<8x16xf32> to vector<8xf32>
    %15 = vector.shape_cast %14 : vector<8xf32> to vector<8x1xf32>
    %16 = vector.broadcast %15 : vector<8x1xf32> to vector<8x16xf32>
    %17 = arith.subf %9, %16 : vector<8x16xf32>
    %18 = math.exp %17 : vector<8x16xf32>
    %cst_4 = arith.constant dense<0.000000e+00> : vector<8xf32>
    %19 = vector.multi_reduction <add>, %18, %cst_4 [1] : vector<8x16xf32> to vector<8xf32>
    %20 = vector.shape_cast %19 : vector<8xf32> to vector<8x1xf32>
    %21 = math.log %20 : vector<8x1xf32>
    %22 = arith.addf %15, %21 : vector<8x1xf32>
    %cst_5 = arith.constant 0.000000e+00 : f32
    %23 = vector.broadcast %cst_5 : f32 to vector<8x16xf32>
    %24 = arith.select %13, %9, %23 : vector<8x16xi1>, vector<8x16xf32>
    %cst_6 = arith.constant dense<0.000000e+00> : vector<8xf32>
    %25 = vector.multi_reduction <add>, %24, %cst_6 [1] : vector<8x16xf32> to vector<8xf32>
    %26 = vector.shape_cast %25 : vector<8xf32> to vector<8x1xf32>
    %27 = arith.subf %22, %26 : vector<8x1xf32>
    %cst_7 = arith.constant dense<0.000000e+00> : vector<1xf32>
    %28 = vector.multi_reduction <add>, %27, %cst_7 [0] : vector<8x1xf32> to vector<1xf32>
    %29 = vector.shape_cast %28 : vector<1xf32> to vector<1x1xf32>
    %cst_8 = arith.constant 1.250000e-01 : f32
    %30 = vector.broadcast %cst_8 : f32 to vector<1x1xf32>
    %31 = arith.mulf %29, %30 : vector<1x1xf32>
    %32 = vector.broadcast %5 : f32 to vector<1x1xf32>
    %33 = arith.mulf %31, %32 : vector<1x1xf32>
    %c0_9 = arith.constant 0 : index
    %c0_10 = arith.constant 0 : index
    %34 = vector.load %arg3[%c0_9, %c0_10] : memref<1x8xf32, #tpu.memory_space<vmem>>, vector<1x8xf32>
    %c0_11 = arith.constant 0 : index
    %c0_12 = arith.constant 0 : index
    %35 = vector.load %arg4[%c0_11, %c0_12] : memref<1x8xf32, #tpu.memory_space<vmem>>, vector<1x8xf32>
    %36 = arith.subf %34, %35 : vector<1x8xf32>
    %37 = math.absf %36 : vector<1x8xf32>
    %cst_13 = arith.constant dense<0.000000e+00> : vector<1xf32>
    %38 = vector.multi_reduction <add>, %37, %cst_13 [1] : vector<1x8xf32> to vector<1xf32>
    %39 = vector.shape_cast %38 : vector<1xf32> to vector<1x1xf32>
    %cst_14 = arith.constant dense<0.000000e+00> : vector<1xf32>
    %40 = vector.multi_reduction <add>, %39, %cst_14 [0] : vector<1x1xf32> to vector<1xf32>
    %41 = vector.shape_cast %40 : vector<1xf32> to vector<1x1xf32>
    %cst_15 = arith.constant 1.250000e-01 : f32
    %42 = vector.broadcast %cst_15 : f32 to vector<1x1xf32>
    %43 = arith.mulf %41, %42 : vector<1x1xf32>
    %44 = vector.broadcast %6 : f32 to vector<1x1xf32>
    %45 = arith.mulf %43, %44 : vector<1x1xf32>
    %c0_16 = arith.constant 0 : index
    %c0_17 = arith.constant 0 : index
    %46 = vector.load %arg5[%c0_16, %c0_17] : memref<8x4xf32, #tpu.memory_space<vmem>>, vector<8x4xf32>
    %c0_18 = arith.constant 0 : index
    %c0_19 = arith.constant 0 : index
    %47 = vector.load %arg6[%c0_18, %c0_19] : memref<8x4xf32, #tpu.memory_space<vmem>>, vector<8x4xf32>
    %48 = arith.subf %46, %47 : vector<8x4xf32>
    %49 = math.absf %48 : vector<8x4xf32>
    %cst_20 = arith.constant dense<0.000000e+00> : vector<8xf32>
    %50 = vector.multi_reduction <add>, %49, %cst_20 [1] : vector<8x4xf32> to vector<8xf32>
    %51 = vector.shape_cast %50 : vector<8xf32> to vector<8x1xf32>
    %cst_21 = arith.constant dense<0.000000e+00> : vector<1xf32>
    %52 = vector.multi_reduction <add>, %51, %cst_21 [0] : vector<8x1xf32> to vector<1xf32>
    %53 = vector.shape_cast %52 : vector<1xf32> to vector<1x1xf32>
    %cst_22 = arith.constant 3.125000e-02 : f32
    %54 = vector.broadcast %cst_22 : f32 to vector<1x1xf32>
    %55 = arith.mulf %53, %54 : vector<1x1xf32>
    %56 = vector.broadcast %8 : f32 to vector<1x1xf32>
    %57 = arith.mulf %55, %56 : vector<1x1xf32>
    %c0_23 = arith.constant 0 : index
    %c0_24 = arith.constant 0 : index
    %c0_25 = arith.constant 0 : index
    %58 = vector.load %arg7[%c0_23, %c0_24, %c0_25] : memref<32x2x4xf32, #tpu.memory_space<vmem>>, vector<32x2x4xf32>
    %c0_26 = arith.constant 0 : index
    %c0_27 = arith.constant 0 : index
    %59 = vector.load %arg8[%c0_26, %c0_27] : memref<2x4xf32, #tpu.memory_space<vmem>>, vector<2x4xf32>
    %60 = vector.extract_strided_slice %58 {offsets = [0, 0, 0], sizes = [32, 2, 1], strides = [1, 1, 1]} : vector<32x2x4xf32> to vector<32x2x1xf32>
    %61 = vector.broadcast %60 : vector<32x2x1xf32> to vector<32x2x4xf32>
    %62 = arith.subf %61, %58 : vector<32x2x4xf32>
    %cst_28 = arith.constant 9.99999971E-10 : f32
    %63 = vector.broadcast %cst_28 : f32 to vector<32x2x4xf32>
    %64 = arith.addf %62, %63 : vector<32x2x4xf32>
    %65 = arith.mulf %64, %64 : vector<32x2x4xf32>
    %cst_29 = arith.constant dense<0.000000e+00> : vector<2x4xf32>
    %66 = vector.multi_reduction <add>, %65, %cst_29 [0] : vector<32x2x4xf32> to vector<2x4xf32>
    %67 = math.sqrt %66 : vector<2x4xf32>
    %68 = vector.broadcast %4 : f32 to vector<2x4xf32>
    %69 = arith.subf %68, %67 : vector<2x4xf32>
    %cst_30 = arith.constant 0.000000e+00 : f32
    %70 = vector.broadcast %cst_30 : f32 to vector<2x4xf32>
    %71 = arith.maximumf %69, %70 : vector<2x4xf32>
    %cst_31 = arith.constant 5.000000e-01 : f32
    %72 = vector.broadcast %cst_31 : f32 to vector<2x4xf32>
    %73 = arith.mulf %72, %59 : vector<2x4xf32>
    %74 = arith.mulf %73, %66 : vector<2x4xf32>
    %cst_32 = arith.constant 1.000000e+00 : f32
    %75 = vector.broadcast %cst_32 : f32 to vector<2x4xf32>
    %76 = arith.subf %75, %59 : vector<2x4xf32>
    %cst_33 = arith.constant 5.000000e-01 : f32
    %77 = vector.broadcast %cst_33 : f32 to vector<2x4xf32>
    %78 = arith.mulf %77, %76 : vector<2x4xf32>
    %79 = arith.mulf %71, %71 : vector<2x4xf32>
    %80 = arith.mulf %78, %79 : vector<2x4xf32>
    %81 = arith.addf %74, %80 : vector<2x4xf32>
    %82 = tpu.iota {dimensions = array<i32: 1>} : vector<2x4xi32>
    %c1_i32 = arith.constant 1 : i32
    %83 = vector.broadcast %c1_i32 : i32 to vector<2x4xi32>
    %84 = arith.cmpi sge, %82, %83 : vector<2x4xi32>
    %cst_34 = arith.constant 0.000000e+00 : f32
    %85 = vector.broadcast %cst_34 : f32 to vector<2x4xf32>
    %86 = arith.select %84, %81, %85 : vector<2x4xi1>, vector<2x4xf32>
    %cst_35 = arith.constant dense<0.000000e+00> : vector<2xf32>
    %87 = vector.multi_reduction <add>, %86, %cst_35 [1] : vector<2x4xf32> to vector<2xf32>
    %88 = vector.shape_cast %87 : vector<2xf32> to vector<2x1xf32>
    %cst_36 = arith.constant dense<0.000000e+00> : vector<1xf32>
    %89 = vector.multi_reduction <add>, %88, %cst_36 [0] : vector<2x1xf32> to vector<1xf32>
    %90 = vector.shape_cast %89 : vector<1xf32> to vector<1x1xf32>
    %91 = vector.broadcast %7 : f32 to vector<1x1xf32>
    %92 = arith.mulf %90, %91 : vector<1x1xf32>
    %93 = vector.broadcast %0 : f32 to vector<1x1xf32>
    %94 = arith.mulf %93, %33 : vector<1x1xf32>
    %95 = vector.broadcast %1 : f32 to vector<1x1xf32>
    %96 = arith.mulf %95, %45 : vector<1x1xf32>
    %97 = arith.addf %94, %96 : vector<1x1xf32>
    %98 = vector.broadcast %2 : f32 to vector<1x1xf32>
    %99 = arith.mulf %98, %92 : vector<1x1xf32>
    %100 = arith.addf %97, %99 : vector<1x1xf32>
    %101 = vector.broadcast %3 : f32 to vector<1x1xf32>
    %102 = arith.mulf %101, %57 : vector<1x1xf32>
    %103 = arith.addf %100, %102 : vector<1x1xf32>
    %104 = tpu.iota {dimensions = array<i32: 1>} : vector<1x128xi32>
    %c0_i32 = arith.constant 0 : i32
    %105 = vector.broadcast %c0_i32 : i32 to vector<1x128xi32>
    %106 = arith.cmpi eq, %104, %105 : vector<1x128xi32>
    %cst_37 = arith.constant 0.000000e+00 : f32
    %107 = vector.shape_cast %103 : vector<1x1xf32> to vector<1x1xf32>
    %108 = vector.broadcast %107 : vector<1x1xf32> to vector<1x128xf32>
    %109 = vector.broadcast %cst_37 : f32 to vector<1x128xf32>
    %110 = arith.select %106, %108, %109 : vector<1x128xi1>, vector<1x128xf32>
    %c1_i32_38 = arith.constant 1 : i32
    %111 = vector.broadcast %c1_i32_38 : i32 to vector<1x128xi32>
    %112 = arith.cmpi eq, %104, %111 : vector<1x128xi32>
    %cst_39 = arith.constant 0.000000e+00 : f32
    %113 = vector.shape_cast %33 : vector<1x1xf32> to vector<1x1xf32>
    %114 = vector.broadcast %113 : vector<1x1xf32> to vector<1x128xf32>
    %115 = vector.broadcast %cst_39 : f32 to vector<1x128xf32>
    %116 = arith.select %112, %114, %115 : vector<1x128xi1>, vector<1x128xf32>
    %117 = arith.addf %110, %116 : vector<1x128xf32>
    %c2_i32 = arith.constant 2 : i32
    %118 = vector.broadcast %c2_i32 : i32 to vector<1x128xi32>
    %119 = arith.cmpi eq, %104, %118 : vector<1x128xi32>
    %cst_40 = arith.constant 0.000000e+00 : f32
    %120 = vector.shape_cast %45 : vector<1x1xf32> to vector<1x1xf32>
    %121 = vector.broadcast %120 : vector<1x1xf32> to vector<1x128xf32>
    %122 = vector.broadcast %cst_40 : f32 to vector<1x128xf32>
    %123 = arith.select %119, %121, %122 : vector<1x128xi1>, vector<1x128xf32>
    %124 = arith.addf %117, %123 : vector<1x128xf32>
    %c3_i32 = arith.constant 3 : i32
    %125 = vector.broadcast %c3_i32 : i32 to vector<1x128xi32>
    %126 = arith.cmpi eq, %104, %125 : vector<1x128xi32>
    %cst_41 = arith.constant 0.000000e+00 : f32
    %127 = vector.shape_cast %92 : vector<1x1xf32> to vector<1x1xf32>
    %128 = vector.broadcast %127 : vector<1x1xf32> to vector<1x128xf32>
    %129 = vector.broadcast %cst_41 : f32 to vector<1x128xf32>
    %130 = arith.select %126, %128, %129 : vector<1x128xi1>, vector<1x128xf32>
    %131 = arith.addf %124, %130 : vector<1x128xf32>
    %c4_i32 = arith.constant 4 : i32
    %132 = vector.broadcast %c4_i32 : i32 to vector<1x128xi32>
    %133 = arith.cmpi eq, %104, %132 : vector<1x128xi32>
    %cst_42 = arith.constant 0.000000e+00 : f32
    %134 = vector.shape_cast %57 : vector<1x1xf32> to vector<1x1xf32>
    %135 = vector.broadcast %134 : vector<1x1xf32> to vector<1x128xf32>
    %136 = vector.broadcast %cst_42 : f32 to vector<1x128xf32>
    %137 = arith.select %133, %135, %136 : vector<1x128xi1>, vector<1x128xf32>
    %138 = arith.addf %131, %137 : vector<1x128xf32>
    %c0_43 = arith.constant 0 : index
    %c0_44 = arith.constant 0 : index
    %139 = vector.load %arg9[%c0_43, %c0_44] : memref<1x128xf32, #tpu.memory_space<vmem>>, vector<1x128xf32>
    tpu.vector_store %arg9[%c0_43, %c0_44], %138 {strides = array<i32>} : memref<1x128xf32, #tpu.memory_space<vmem>>, vector<1x128xf32>,
    return
  }
}

</mosaic_0001>

<llo_original>
// kernel: _blur_retrieval_forward.1
$region0: #{_blur_retrieval_forward.1}
  #allocation0 [shape = 'u32[]', space=smem, size = 0x4, offset = 0x4, fixed_abs, tag = 'smem constant byte address 0x4 - core index']
  #allocation1 [shape = 'u32[144,128]{1,0:T(1,128)}', space=vmem, size = 0x12000, scoped, tag = 'internal scratch']
  %s0 = inlined_call_operand.vmem [shape: f32[16], index: 0, kind: input, shape index: {}]
  %s1 = inlined_call_operand.vmem [shape: f32[8,16], index: 1, kind: input, shape index: {}]
  %s2 = inlined_call_operand.vmem [shape: s32[8,1], index: 2, kind: input, shape index: {}]
  %s3 = inlined_call_operand.vmem [shape: f32[1,8], index: 3, kind: input, shape index: {}]
  %s4 = inlined_call_operand.vmem [shape: f32[1,8], index: 4, kind: input, shape index: {}]
  %s5 = inlined_call_operand.vmem [shape: f32[8,4], index: 5, kind: input, shape index: {}]
  %s6 = inlined_call_operand.vmem [shape: f32[8,4], index: 6, kind: input, shape index: {}]
  %s7 = inlined_call_operand.vmem [shape: f32[32,2,4], index: 7, kind: input, shape index: {}]
  %s8 = inlined_call_operand.vmem [shape: f32[2,4], index: 8, kind: input, shape index: {}]
  %s9 = inlined_call_operand.vmem [shape: f32[1,128], index: 9, kind: output, shape index: {}]
  %s10 = sld [smem:[#allocation0]]
  $region50: #{_blur_retrieval_forward.1} parent=0
    _
  %s12 = ssub.s32 1, %s10
  %s13 = scalar_select 0, %s12, %s10
  $region1: #{_blur_retrieval_forward.1} parent=0
    #allocation2 [shape = 'u8[512]{0}', space=smem, size = 0x200, scoped, tag = 'input window, operand 0, single buffered']
    #allocation3 [shape = 's32[1]{0}', space=sflag, size = 0x4, scoped, tag = 'scoped memory for _blur_retrieval_forward.1']
    %14 = vsyncpa [#allocation3], 0
    // Predicated region
    $region2: #{_blur_retrieval_forward.1} parent=1 // pred_check
      _
    $region3: #{_blur_retrieval_forward.1} parent=1 // pred_check_branch
      %16 = sbr.rel (0) target = $region5
    $region4: #{_blur_retrieval_forward.1} parent=1 // pred_region
      %s18 = ssub.s32 16, 16
      %19 = vsyncadd [#allocation3], %s18
      %s21 = sshll.u32 %s0, 4
      %s22 = int_to_ptr.vmem [resolvable:$true] %s21
      %24 = dma.vmem_to_smem %s22, 16, [#allocation2], [#allocation3]
    $region5: #{_blur_retrieval_forward.1} parent=1 // pred_fallthru
      _
    // Predicated region
    $region6: #{_blur_retrieval_forward.1} parent=1 // pred_check
      _
    $region7: #{_blur_retrieval_forward.1} parent=1 // pred_check_branch
      %26 = sbr.rel (0) target = $region9
    $region8: #{_blur_retrieval_forward.1} parent=1 // pred_region
      _
    $region9: #{_blur_retrieval_forward.1} parent=1 // pred_fallthru
      _
    // Predicated region
    $region10: #{_blur_retrieval_forward.1} parent=1 // pred_check
      _
    $region11: #{_blur_retrieval_forward.1} parent=1 // pred_check_branch
      %28 = sbr.rel (0) target = $region13
    $region12: #{_blur_retrieval_forward.1} parent=1 // pred_region
      _
    $region13: #{_blur_retrieval_forward.1} parent=1 // pred_fallthru
      _
    // Predicated region
    $region14: #{_blur_retrieval_forward.1} parent=1 // pred_check
      _
    $region15: #{_blur_retrieval_forward.1} parent=1 // pred_check_branch
      %30 = sbr.rel (0) target = $region17
    $region16: #{_blur_retrieval_forward.1} parent=1 // pred_region
      _
    $region17: #{_blur_retrieval_forward.1} parent=1 // pred_fallthru
      _
    // Predicated region
    $region18: #{_blur_retrieval_forward.1} parent=1 // pred_check
      _
    $region19: #{_blur_retrieval_forward.1} parent=1 // pred_check_branch
      %32 = sbr.rel (0) target = $region21
    $region20: #{_blur_retrieval_forward.1} parent=1 // pred_region
      _
    $region21: #{_blur_retrieval_forward.1} parent=1 // pred_fallthru
      _
    // Predicated region
    $region22: #{_blur_retrieval_forward.1} parent=1 // pred_check
      _
    $region23: #{_blur_retrieval_forward.1} parent=1 // pred_check_branch
      %34 = sbr.rel (0) target = $region25
    $region24: #{_blur_retrieval_forward.1} parent=1 // pred_region
      _
    $region25: #{_blur_retrieval_forward.1} parent=1 // pred_fallthru
      _
    // Predicated region
    $region26: #{_blur_retrieval_forward.1} parent=1 // pred_check
      _
    $region27: #{_blur_retrieval_forward.1} parent=1 // pred_check_branch
      %36 = sbr.rel (0) target = $region29
    $region28: #{_blur_retrieval_forward.1} parent=1 // pred_region
      _
    $region29: #{_blur_retrieval_forward.1} parent=1 // pred_fallthru
      _
    // Predicated region
    $region30: #{_blur_retrieval_forward.1} parent=1 // pred_check
      _
    $region31: #{_blur_retrieval_forward.1} parent=1 // pred_check_branch
      %38 = sbr.rel (0) target = $region33
    $region32: #{_blur_retrieval_forward.1} parent=1 // pred_region
      _
    $region33: #{_blur_retrieval_forward.1} parent=1 // pred_fallthru
      _
    // Predicated region
    $region34: #{_blur_retrieval_forward.1} parent=1 // pred_check
      _
    $region35: #{_blur_retrieval_forward.1} parent=1 // pred_check_branch
      %40 = sbr.rel (0) target = $region37
    $region36: #{_blur_retrieval_forward.1} parent=1 // pred_region
      _
    $region37: #{_blur_retrieval_forward.1} parent=1 // pred_fallthru
      _
    // Predicated region
    $region38: #{_blur_retrieval_forward.1} parent=1 // pred_check
      _
    $region39: #{_blur_retrieval_forward.1} parent=1 // pred_check_branch
      %42 = sbr.rel (0) target = $region41
    $region40: #{_blur_retrieval_forward.1} parent=1 // pred_region
      %43 = dma.done [#allocation3], 16
    $region41: #{_blur_retrieval_forward.1} parent=1 // pred_fallthru
      _
    %44 = sfence
    %s45 = sld [smem:[#allocation2]]
    %s46 = sld [smem:[#allocation2 + $0x1]]
    %s47 = sld [smem:[#allocation2 + $0x2]]
    %s48 = sld [smem:[#allocation2 + $0x3]]
    %s49 = sld [smem:[#allocation2 + $0x4]]
    %s50 = sld [smem:[#allocation2 + $0x5]]
    %s51 = sld [smem:[#allocation2 + $0x6]]
    %s52 = sld [smem:[#allocation2 + $0x7]]
    %s53 = sld [smem:[#allocation2 + $0x8]]
    %v54 = vld [vmem:[%s1] sm:$0xff]
    %v55 = vld [vmem:[%s2] sm:$0xff]
    %v56 = vlaneseq
    %v57 = vand.u32 %v56, 127
    %58 = vset.pattern.permute.xlu0 0
    %59 = vperm.xlu0 %58, %v55
    %v60 = vpop.permute.xlu0 %59
    %vm61 = vcmp.eq.s32.totalorder %v57, %v60
    %vm62 = vcmask 130048
    %v63 = vsel %vm62, %v54, -inf
    %64 = vmax.xlane.f32.xlu0 %v63
    %v65 = vpop.xlane.xlu0 %64
    %v66 = vsub.f32 %v54, %v65
    %v67 = vmul.f32 %v66, 1.442695
    %v68 = vpow.pop %v67
    %v69 = vsel %vm62, %v68, 0.0
    %70 = vadd.xlane.f32.xlu0 %v69
    %v71 = vpop.xlane.xlu0 %70
    %v72 = vlog2.pop %v71
    %v73 = vmul.f32 %v72, 0.6931472
    %v74 = vadd.f32 %v65, %v73
    %v75 = vsel %vm61, %v54, 0.0
    %v76 = vsel %vm62, %v75, 0.0
    %77 = vadd.xlane.f32.xlu0 %v76
    %v78 = vpop.xlane.xlu0 %77
    %v79 = vsub.f32 %v74, %v78
    %v80 = vrot.slane %v79, 4
    %v81 = vadd.f32 %v79, %v80
    %v82 = vrot.slane %v81, 2
    %v83 = vadd.f32 %v81, %v82
    %v84 = vrot.slane %v83, 1
    %v85 = vadd.f32 %v83, %v84
    %v86 = vmul.f32 %v85, 0.125
    %v87 = vstv %s50
    %v88 = vmul.f32 %v86, %v87
    %v89 = vld [vmem:[%s3] sm:$0x1]
    %v90 = vld [vmem:[%s4] sm:$0x1]
    %v91 = vsub.f32 %v89, %v90
    %v92 = vand.u32 2147483647, %v91
    %vm93 = vcmask 57344
    %v94 = vsel %vm93, %v92, 0.0
    %95 = vadd.xlane.f32.xlu0 %v94
    %v96 = vpop.xlane.xlu0 %95
    %v97 = vadd.f32 %v96, 0.0
    %v98 = vmul.f32 %v97, 0.125
    %v99 = vstv %s51
    %v100 = vmul.f32 %v98, %v99
    %v101 = vld [vmem:[%s5] sm:$0xff]
    %v102 = vld [vmem:[%s6] sm:$0xff]
    %v103 = vsub.f32 %v101, %v102
    %v104 = vand.u32 2147483647, %v103
    %vm105 = vcmask 31744
    %v106 = vsel %vm105, %v104, 0.0
    %107 = vadd.xlane.f32.xlu0 %v106
    %v108 = vpop.xlane.xlu0 %107
    %v109 = vrot.slane %v108, 4
    %v110 = vadd.f32 %v108, %v109
    %v111 = vrot.slane %v110, 2
    %v112 = vadd.f32 %v110, %v111
    %v113 = vrot.slane %v112, 1
    %v114 = vadd.f32 %v112, %v113
    %v115 = vmul.f32 %v114, 0.03125
    %v116 = vstv %s53
    %v117 = vmul.f32 %v115, %v116
    %v118 = vld [vmem:[%s7] sm:$0x3]
    %v119 = vld [vmem:[%s7 + $0x2] sm:$0x3]
    %v120 = vld [vmem:[%s7 + $0x4] sm:$0x3]
    %v121 = vld [vmem:[%s7 + $0x6] sm:$0x3]
    %v122 = vld [vmem:[%s7 + $0x8] sm:$0x3]
    %v123 = vld [vmem:[%s7 + $0xa] sm:$0x3]
    %v124 = vld [vmem:[%s7 + $0xc] sm:$0x3]
    %v125 = vld [vmem:[%s7 + $0xe] sm:$0x3]
    %v126 = vld [vmem:[%s7 + $0x10] sm:$0x3]
    %v127 = vld [vmem:[%s7 + $0x12] sm:$0x3]
    %v128 = vld [vmem:[%s7 + $0x14] sm:$0x3]
    %v129 = vld [vmem:[%s7 + $0x16] sm:$0x3]
    %v130 = vld [vmem:[%s7 + $0x18] sm:$0x3]
    %v131 = vld [vmem:[%s7 + $0x1a] sm:$0x3]
    %v132 = vld [vmem:[%s7 + $0x1c] sm:$0x3]
    %v133 = vld [vmem:[%s7 + $0x1e] sm:$0x3]
    %v134 = vld [vmem:[%s7 + $0x20] sm:$0x3]
    %v135 = vld [vmem:[%s7 + $0x22] sm:$0x3]
    %v136 = vld [vmem:[%s7 + $0x24] sm:$0x3]
    %v137 = vld [vmem:[%s7 + $0x26] sm:$0x3]
    %v138 = vld [vmem:[%s7 + $0x28] sm:$0x3]
    %v139 = vld [vmem:[%s7 + $0x2a] sm:$0x3]
    %v140 = vld [vmem:[%s7 + $0x2c] sm:$0x3]
    %v141 = vld [vmem:[%s7 + $0x2e] sm:$0x3]
    %v142 = vld [vmem:[%s7 + $0x30] sm:$0x3]
    %v143 = vld [vmem:[%s7 + $0x32] sm:$0x3]
    %v144 = vld [vmem:[%s7 + $0x34] sm:$0x3]
    %v145 = vld [vmem:[%s7 + $0x36] sm:$0x3]
    %v146 = vld [vmem:[%s7 + $0x38] sm:$0x3]
    %v147 = vld [vmem:[%s7 + $0x3a] sm:$0x3]
    %v148 = vld [vmem:[%s7 + $0x3c] sm:$0x3]
    %v149 = vld [vmem:[%s7 + $0x3e] sm:$0x3]
    %v150 = vld [vmem:[%s8] sm:$0x3]
    %152 = vset.pattern.permute.xlu0 0
    %153 = vperm.xlu0 %152, %v118
    %v154 = vpop.permute.xlu0 %153
    %157 = vset.pattern.permute.xlu0 0
    %158 = vperm.xlu0 %157, %v119
    %v159 = vpop.permute.xlu0 %158
    %162 = vset.pattern.permute.xlu0 0
    %163 = vperm.xlu0 %162, %v120
    %v164 = vpop.permute.xlu0 %163
    %167 = vset.pattern.permute.xlu0 0
    %168 = vperm.xlu0 %167, %v121
    %v169 = vpop.permute.xlu0 %168
    %172 = vset.pattern.permute.xlu0 0
    %173 = vperm.xlu0 %172, %v122
    %v174 = vpop.permute.xlu0 %173
    %177 = vset.pattern.permute.xlu0 0
    %178 = vperm.xlu0 %177, %v123
    %v179 = vpop.permute.xlu0 %178
    %182 = vset.pattern.permute.xlu0 0
    %183 = vperm.xlu0 %182, %v124
    %v184 = vpop.permute.xlu0 %183
    %187 = vset.pattern.permute.xlu0 0
    %188 = vperm.xlu0 %187, %v125
    %v189 = vpop.permute.xlu0 %188
    %192 = vset.pattern.permute.xlu0 0
    %193 = vperm.xlu0 %192, %v126
    %v194 = vpop.permute.xlu0 %193
    %197 = vset.pattern.permute.xlu0 0
    %198 = vperm.xlu0 %197, %v127
    %v199 = vpop.permute.xlu0 %198
    %202 = vset.pattern.permute.xlu0 0
    %203 = vperm.xlu0 %202, %v128
    %v204 = vpop.permute.xlu0 %203
    %207 = vset.pattern.permute.xlu0 0
    %208 = vperm.xlu0 %207, %v129
    %v209 = vpop.permute.xlu0 %208
    %212 = vset.pattern.permute.xlu0 0
    %213 = vperm.xlu0 %212, %v130
    %v214 = vpop.permute.xlu0 %213
    %217 = vset.pattern.permute.xlu0 0
    %218 = vperm.xlu0 %217, %v131
    %v219 = vpop.permute.xlu0 %218
    %222 = vset.pattern.permute.xlu0 0
    %223 = vperm.xlu0 %222, %v132
    %v224 = vpop.permute.xlu0 %223
    %227 = vset.pattern.permute.xlu0 0
    %228 = vperm.xlu0 %227, %v133
    %v229 = vpop.permute.xlu0 %228
    %232 = vset.pattern.permute.xlu0 0
    %233 = vperm.xlu0 %232, %v134
    %v234 = vpop.permute.xlu0 %233
    %237 = vset.pattern.permute.xlu0 0
    %238 = vperm.xlu0 %237, %v135
    %v239 = vpop.permute.xlu0 %238
    %242 = vset.pattern.permute.xlu0 0
    %243 = vperm.xlu0 %242, %v136
    %v244 = vpop.permute.xlu0 %243
    %247 = vset.pattern.permute.xlu0 0
    %248 = vperm.xlu0 %247, %v137
    %v249 = vpop.permute.xlu0 %248
    %252 = vset.pattern.permute.xlu0 0
    %253 = vperm.xlu0 %252, %v138
    %v254 = vpop.permute.xlu0 %253
    %257 = vset.pattern.permute.xlu0 0
    %258 = vperm.xlu0 %257, %v139
    %v259 = vpop.permute.xlu0 %258
    %262 = vset.pattern.permute.xlu0 0
    %263 = vperm.xlu0 %262, %v140
    %v264 = vpop.permute.xlu0 %263
    %267 = vset.pattern.permute.xlu0 0
    %268 = vperm.xlu0 %267, %v141
    %v269 = vpop.permute.xlu0 %268
    %272 = vset.pattern.permute.xlu0 0
    %273 = vperm.xlu0 %272, %v142
    %v274 = vpop.permute.xlu0 %273
    %277 = vset.pattern.permute.xlu0 0
    %278 = vperm.xlu0 %277, %v143
    %v279 = vpop.permute.xlu0 %278
    %282 = vset.pattern.permute.xlu0 0
    %283 = vperm.xlu0 %282, %v144
    %v284 = vpop.permute.xlu0 %283
    %287 = vset.pattern.permute.xlu0 0
    %288 = vperm.xlu0 %287, %v145
    %v289 = vpop.permute.xlu0 %288
    %292 = vset.pattern.permute.xlu0 0
    %293 = vperm.xlu0 %292, %v146
    %v294 = vpop.permute.xlu0 %293
    %297 = vset.pattern.permute.xlu0 0
    %298 = vperm.xlu0 %297, %v147
    %v299 = vpop.permute.xlu0 %298
    %302 = vset.pattern.permute.xlu0 0
    %303 = vperm.xlu0 %302, %v148
    %v304 = vpop.permute.xlu0 %303
    %307 = vset.pattern.permute.xlu0 0
    %308 = vperm.xlu0 %307, %v149
    %v309 = vpop.permute.xlu0 %308
    %v311 = vsub.f32 %v154, %v118
    %v312 = vsub.f32 %v159, %v119
    %v313 = vsub.f32 %v164, %v120
    %v314 = vsub.f32 %v169, %v121
    %v315 = vsub.f32 %v174, %v122
    %v316 = vsub.f32 %v179, %v123
    %v317 = vsub.f32 %v184, %v124
    %v318 = vsub.f32 %v189, %v125
    %v319 = vsub.f32 %v194, %v126
    %v320 = vsub.f32 %v199, %v127
    %v321 = vsub.f32 %v204, %v128
    %v322 = vsub.f32 %v209, %v129
    %v323 = vsub.f32 %v214, %v130
    %v324 = vsub.f32 %v219, %v131
    %v325 = vsub.f32 %v224, %v132
    %v326 = vsub.f32 %v229, %v133
    %v327 = vsub.f32 %v234, %v134
    %v328 = vsub.f32 %v239, %v135
    %v329 = vsub.f32 %v244, %v136
    %v330 = vsub.f32 %v249, %v137
    %v331 = vsub.f32 %v254, %v138
    %v332 = vsub.f32 %v259, %v139
    %v333 = vsub.f32 %v264, %v140
    %v334 = vsub.f32 %v269, %v141
    %v335 = vsub.f32 %v274, %v142
    %v336 = vsub.f32 %v279, %v143
    %v337 = vsub.f32 %v284, %v144
    %v338 = vsub.f32 %v289, %v145
    %v339 = vsub.f32 %v294, %v146
    %v340 = vsub.f32 %v299, %v147
    %v341 = vsub.f32 %v304, %v148
    %v342 = vsub.f32 %v309, %v149
    %v343 = vadd.f32 %v311, 1e-09
    %v344 = vadd.f32 %v312, 1e-09
    %v345 = vadd.f32 %v313, 1e-09
    %v346 = vadd.f32 %v314, 1e-09
    %v347 = vadd.f32 %v315, 1e-09
    %v348 = vadd.f32 %v316, 1e-09
    %v349 = vadd.f32 %v317, 1e-09
    %v350 = vadd.f32 %v318, 1e-09
    %v351 = vadd.f32 %v319, 1e-09
    %v352 = vadd.f32 %v320, 1e-09
    %v353 = vadd.f32 %v321, 1e-09
    %v354 = vadd.f32 %v322, 1e-09
    %v355 = vadd.f32 %v323, 1e-09
    %v356 = vadd.f32 %v324, 1e-09
    %v357 = vadd.f32 %v325, 1e-09
    %v358 = vadd.f32 %v326, 1e-09
    %v359 = vadd.f32 %v327, 1e-09
    %v360 = vadd.f32 %v328, 1e-09
    %v361 = vadd.f32 %v329, 1e-09
    %v362 = vadd.f32 %v330, 1e-09
    %v363 = vadd.f32 %v331, 1e-09
    %v364 = vadd.f32 %v332, 1e-09
    %v365 = vadd.f32 %v333, 1e-09
    %v366 = vadd.f32 %v334, 1e-09
    %v367 = vadd.f32 %v335, 1e-09
    %v368 = vadd.f32 %v336, 1e-09
    %v369 = vadd.f32 %v337, 1e-09
    %v370 = vadd.f32 %v338, 1e-09
    %v371 = vadd.f32 %v339, 1e-09
    %v372 = vadd.f32 %v340, 1e-09
    %v373 = vadd.f32 %v341, 1e-09
    %v374 = vadd.f32 %v342, 1e-09
    %v375 = vmul.f32 %v343, %v343
    %v376 = vmul.f32 %v344, %v344
    %v377 = vmul.f32 %v345, %v345
    %v378 = vmul.f32 %v346, %v346
    %v379 = vmul.f32 %v347, %v347
    %v380 = vmul.f32 %v348, %v348
    %v381 = vmul.f32 %v349, %v349
    %v382 = vmul.f32 %v350, %v350
    %v383 = vmul.f32 %v351, %v351
    %v384 = vmul.f32 %v352, %v352
    %v385 = vmul.f32 %v353, %v353
    %v386 = vmul.f32 %v354, %v354
    %v387 = vmul.f32 %v355, %v355
    %v388 = vmul.f32 %v356, %v356
    %v389 = vmul.f32 %v357, %v357
    %v390 = vmul.f32 %v358, %v358
    %v391 = vmul.f32 %v359, %v359
    %v392 = vmul.f32 %v360, %v360
    %v393 = vmul.f32 %v361, %v361
    %v394 = vmul.f32 %v362, %v362
    %v395 = vmul.f32 %v363, %v363
    %v396 = vmul.f32 %v364, %v364
    %v397 = vmul.f32 %v365, %v365
    %v398 = vmul.f32 %v366, %v366
    %v399 = vmul.f32 %v367, %v367
    %v400 = vmul.f32 %v368, %v368
    %v401 = vmul.f32 %v369, %v369
    %v402 = vmul.f32 %v370, %v370
    %v403 = vmul.f32 %v371, %v371
    %v404 = vmul.f32 %v372, %v372
    %v405 = vmul.f32 %v373, %v373
    %v406 = vmul.f32 %v374, %v374
    %vm407 = vcmask 25600
    %v408 = vsel %vm407, %v375, 0.0
    %v409 = vsel %vm407, %v376, 0.0
    %v410 = vadd.f32 %v408, %v409
    %v411 = vsel %vm407, %v377, 0.0
    %v412 = vadd.f32 %v410, %v411
    %v413 = vsel %vm407, %v378, 0.0
    %v414 = vadd.f32 %v412, %v413
    %v415 = vsel %vm407, %v379, 0.0
    %v416 = vadd.f32 %v414, %v415
    %v417 = vsel %vm407, %v380, 0.0
    %v418 = vadd.f32 %v416, %v417
    %v419 = vsel %vm407, %v381, 0.0
    %v420 = vadd.f32 %v418, %v419
    %v421 = vsel %vm407, %v382, 0.0
    %v422 = vadd.f32 %v420, %v421
    %v423 = vsel %vm407, %v383, 0.0
    %v424 = vadd.f32 %v422, %v423
    %v425 = vsel %vm407, %v384, 0.0
    %v426 = vadd.f32 %v424, %v425
    %v427 = vsel %vm407, %v385, 0.0
    %v428 = vadd.f32 %v426, %v427
    %v429 = vsel %vm407, %v386, 0.0
    %v430 = vadd.f32 %v428, %v429
    %v431 = vsel %vm407, %v387, 0.0
    %v432 = vadd.f32 %v430, %v431
    %v433 = vsel %vm407, %v388, 0.0
    %v434 = vadd.f32 %v432, %v433
    %v435 = vsel %vm407, %v389, 0.0
    %v436 = vadd.f32 %v434, %v435
    %v437 = vsel %vm407, %v390, 0.0
    %v438 = vadd.f32 %v436, %v437
    %v439 = vsel %vm407, %v391, 0.0
    %v440 = vadd.f32 %v438, %v439
    %v441 = vsel %vm407, %v392, 0.0
    %v442 = vadd.f32 %v440, %v441
    %v443 = vsel %vm407, %v393, 0.0
    %v444 = vadd.f32 %v442, %v443
    %v445 = vsel %vm407, %v394, 0.0
    %v446 = vadd.f32 %v444, %v445
    %v447 = vsel %vm407, %v395, 0.0
    %v448 = vadd.f32 %v446, %v447
    %v449 = vsel %vm407, %v396, 0.0
    %v450 = vadd.f32 %v448, %v449
    %v451 = vsel %vm407, %v397, 0.0
    %v452 = vadd.f32 %v450, %v451
    %v453 = vsel %vm407, %v398, 0.0
    %v454 = vadd.f32 %v452, %v453
    %v455 = vsel %vm407, %v399, 0.0
    %v456 = vadd.f32 %v454, %v455
    %v457 = vsel %vm407, %v400, 0.0
    %v458 = vadd.f32 %v456, %v457
    %v459 = vsel %vm407, %v401, 0.0
    %v460 = vadd.f32 %v458, %v459
    %v461 = vsel %vm407, %v402, 0.0
    %v462 = vadd.f32 %v460, %v461
    %v463 = vsel %vm407, %v403, 0.0
    %v464 = vadd.f32 %v462, %v463
    %v465 = vsel %vm407, %v404, 0.0
    %v466 = vadd.f32 %v464, %v465
    %v467 = vsel %vm407, %v405, 0.0
    %v468 = vadd.f32 %v466, %v467
    %v469 = vsel %vm407, %v406, 0.0
    %v470 = vadd.f32 %v468, %v469
    %v471 = vrsqrt.pop %v470
    %v472 = vmul.f32 %v470, %v471
    %vm473 = vcmp.eq.f32.partialorder %v470, inf
    %v474 = vsel %vm473, %v470, %v472
    %vm475 = vcmp.eq.f32.partialorder %v470, 0.0
    %v476 = vand.u32 %v470, 2147483648
    %v477 = vsel %vm475, %v476, %v474
    %v478 = vstv %s49
    %v479 = vsub.f32 %v478, %v477
    %v480 = vmax.f32 %v479, 0.0
    %v481 = vmul.f32 %v150, 0.5
    %v482 = vmul.f32 %v481, %v470
    %v483 = vsub.f32 1.0, %v150
    %v484 = vmul.f32 %v483, 0.5
    %v485 = vmul.f32 %v480, %v480
    %v486 = vmul.f32 %v484, %v485
    %v487 = vadd.f32 %v482, %v486
    %vm488 = vcmp.ge.s32.totalorder %v57, 1
    %v489 = vsel %vm488, %v487, 0.0
    %v490 = vsel %vm407, %v489, 0.0
    %491 = vadd.xlane.f32.xlu0 %v490
    %v492 = vpop.xlane.xlu0 %491
    %vm493 = vcmask 1041408
    %v494 = vsel %vm493, %v492, 0.0
    %v495 = vrot.slane %v494, 4
    %v496 = vadd.f32 %v494, %v495
    %v497 = vrot.slane %v496, 2
    %v498 = vadd.f32 %v496, %v497
    %v499 = vrot.slane %v498, 1
    %v500 = vadd.f32 %v498, %v499
    %v501 = vstv %s52
    %v502 = vmul.f32 %v500, %v501
    %v503 = vstv %s45
    %v504 = vmul.f32 %v503, %v88
    %v505 = vstv %s46
    %v506 = vmul.f32 %v505, %v100
    %v507 = vadd.f32 %v504, %v506
    %v508 = vstv %s47
    %v509 = vmul.f32 %v508, %v502
    %v510 = vadd.f32 %v507, %v509
    %v511 = vstv %s48
    %v512 = vmul.f32 %v511, %v117
    %v513 = vadd.f32 %v510, %v512
    %vm514 = vcmp.eq.s32.totalorder %v57, 0
    %v515 = vsel %vm514, %v513, 0.0
    %vm516 = vcmp.eq.s32.totalorder %v57, 1
    %v517 = vsel %vm516, %v88, 0.0
    %v518 = vadd.f32 %v515, %v517
    %vm519 = vcmp.eq.s32.totalorder %v57, 2
    %v520 = vsel %vm519, %v100, 0.0
    %v521 = vadd.f32 %v518, %v520
    %vm522 = vcmp.eq.s32.totalorder %v57, 3
    %v523 = vsel %vm522, %v502, 0.0
    %v524 = vadd.f32 %v521, %v523
    %vm525 = vcmp.eq.s32.totalorder %v57, 4
    %v526 = vsel %vm525, %v117, 0.0
    %v527 = vadd.f32 %v524, %v526
    %528 = vst [vmem:[%s9] sm:$0x1] %v527
    // Predicated region
    $region42: #{_blur_retrieval_forward.1} parent=1 // pred_check
      _
    $region43: #{_blur_retrieval_forward.1} parent=1 // pred_check_branch
      %530 = sbr.rel (0) target = $region45
    $region44: #{_blur_retrieval_forward.1} parent=1 // pred_region
      _
    $region45: #{_blur_retrieval_forward.1} parent=1 // pred_fallthru
      _
    // Predicated region
    $region46: #{_blur_retrieval_forward.1} parent=1 // pred_check
      _
    $region47: #{_blur_retrieval_forward.1} parent=1 // pred_check_branch
      %532 = sbr.rel (0) target = $region49
    $region48: #{_blur_retrieval_forward.1} parent=1 // pred_region
      _
    $region49: #{_blur_retrieval_forward.1} parent=1 // pred_fallthru
      _
    %533 = vsyncpa [#allocation3], 1

</llo_original>
